<compile_context>
chip_gen: v5e
topology: v5e:2x2
jax: 0.10.0
libtpu: 0.0.40
codegen_flags: <defaults>
</compile_context>

<pallas_src>
import jax
import jax.numpy as jnp
import numpy as np
from jax.experimental import pallas as pl
from jax.experimental.pallas import tpu as pltpu


def _round_up(x, m):
    return ((x + m - 1) // m) * m


# ---------------------------------------------------------------------------
# Kernel: one grid step processes a tile of TP polylines end-to-end.
# ---------------------------------------------------------------------------
def pointnet_kernel(poly_ref, mask_ref, wh_ref, wo_ref, bh_ref, bo_ref, out_ref):
    TP, N, C = poly_ref.shape            # C is already padded to a multiple of 8
    H = wh_ref.shape[1]

    # Flatten the polyline tile so every per-point layer is one big matmul.
    x = poly_ref[...].reshape(TP * N, C)                         # bf16 (TP*N, C)
    m = mask_ref[...].reshape(TP * N, 1)                         # f32  {0, 1}

    # Resident packed weights (bf16) and folded-BN biases (f32).
    wh = wh_ref[...]
    w1 = wh[0:C]                          # (C, H)
    w2a = wh[C:C + H]                     # (H, H)  rows of W2 acting on h1
    w2b = wh[C + H:C + 2 * H]             # (H, H)  rows of W2 acting on pooled1
    w3 = wh[C + 2 * H:C + 3 * H]          # (H, H)
    w4 = wh[C + 3 * H:C + 4 * H]          # (H, H)
    w5 = wo_ref[...]                      # (H, OC)
    bh = bh_ref[...]
    b1, b2, b3, b4 = bh[0:1], bh[1:2], bh[2:3], bh[3:4]          # (1, H) f32
    b5 = bo_ref[0:1]                                             # (1, OC) f32

    # --- pre_mlps: Linear(no bias) + folded BN + ReLU; zero invalid points ---
    h1 = jnp.maximum(
        jnp.dot(x, w1, preferred_element_type=jnp.float32) + b1, 0.0) * m
    pooled1 = jnp.max(h1.reshape(TP, N, H), axis=1)              # (TP, H) sublane/XLU max

    # --- mlps layer 1 on concat([h1, pooled1_bcast]); split the matmul so no
    #     lane-concat is needed, and do the pooled half at (TP, H) only -------
    p2 = jnp.dot(pooled1.astype(jnp.bfloat16), w2b,
                 preferred_element_type=jnp.float32)             # (TP, H)
    p2b = jnp.broadcast_to(p2[:, None, :], (TP, N, H)).reshape(TP * N, H)
    h2 = jnp.maximum(
        jnp.dot(h1.astype(jnp.bfloat16), w2a,
                preferred_element_type=jnp.float32) + p2b + b2, 0.0) * m

    # --- mlps layer 2 ---
    h3 = jnp.maximum(
        jnp.dot(h2.astype(jnp.bfloat16), w3,
                preferred_element_type=jnp.float32) + b3, 0.0) * m
    pooled2 = jnp.max(h3.reshape(TP, N, H), axis=1)              # (TP, H)

    # --- out_mlps: Linear+ReLU, Linear; zero polylines with no valid point ---
    o1 = jnp.maximum(
        jnp.dot(pooled2.astype(jnp.bfloat16), w4,
                preferred_element_type=jnp.float32) + b4, 0.0)
    o2 = jnp.dot(o1.astype(jnp.bfloat16), w5,
                 preferred_element_type=jnp.float32) + b5        # (TP, OC)

    valid = (jnp.max(mask_ref[...], axis=1) > 0.0).astype(jnp.float32)  # (TP, 1)
    out_ref[...] = o2 * valid


# ---------------------------------------------------------------------------
# Host-side wrapper: padding, weight packing, pallas_call.
# ---------------------------------------------------------------------------
def pointnet_polyline_encoder(polylines, polylines_mask, params, tile_polylines=128):
    B, P, N, C = polylines.shape
    H = params["w1"].shape[1]
    OC = params["w5"].shape[1]
    BP = B * P

    C_pad = _round_up(C, 8)
    TP = min(_round_up(tile_polylines, 8), _round_up(BP, 8))
    BP_pad = _round_up(BP, TP)

    # Polyline features in bf16 (halves HBM read traffic); mask stays f32 so
    # all elementwise work in the kernel runs on the f32 VPU path (v5e-safe).
    poly = jnp.zeros((BP_pad, N, C_pad), jnp.bfloat16)
    poly = poly.at[:BP, :, :C].set(polylines.reshape(BP, N, C).astype(jnp.bfloat16))
    mask = jnp.zeros((BP_pad, N, 1), jnp.float32)
    mask = mask.at[:BP].set(polylines_mask.reshape(BP, N, 1).astype(jnp.float32))

    # Pack the 10 weight/bias operands into 4 resident arrays (constant
    # index_maps -> copied into VMEM once, no per-step DMA descriptor churn).
    w1p = jnp.zeros((C_pad, H), jnp.float32).at[:C].set(params["w1"])
    wh = jnp.concatenate([w1p, params["w2"], params["w3"], params["w4"]],
                         axis=0).astype(jnp.bfloat16)            # (C_pad + 4H, H)
    wo = params["w5"].astype(jnp.bfloat16)                       # (H, OC)
    bh = jnp.concatenate(
        [params["b1"], params["b2"], params["b3"], params["b4"],
         jnp.zeros((4, H), jnp.float32)], axis=0)                # (8, H)
    bo = jnp.concatenate(
        [params["b5"], jnp.zeros((7, OC), jnp.float32)], axis=0)  # (8, OC)

    def full_spec(shape):
        return pl.BlockSpec(shape, lambda i: (0,) * len(shape))

    out = pl.pallas_call(
        pointnet_kernel,
        out_shape=jax.ShapeDtypeStruct((BP_pad, OC), jnp.float32),
        grid_spec=pltpu.PrefetchScalarGridSpec(
            num_scalar_prefetch=0,
            grid=(BP_pad // TP,),
            in_specs=[
                pl.BlockSpec((TP, N, C_pad), lambda i: (i, 0, 0)),
                pl.BlockSpec((TP, N, 1), lambda i: (i, 0, 0)),
                full_spec(wh.shape),
                full_spec(wo.shape),
                full_spec(bh.shape),
                full_spec(bo.shape),
            ],
            out_specs=pl.BlockSpec((TP, OC), lambda i: (i, 0)),
        ),
        compiler_params=pltpu.CompilerParams(
            dimension_semantics=("parallel",)),  # megacore-shardable on v7x
    )(poly, mask, wh, wo, bh, bo)
    return out[:BP].reshape(B, P, OC)


# ---------------------------------------------------------------------------
# Parameter init (BN folded, eval mode) and pure-JAX f32 reference.
# ---------------------------------------------------------------------------
def init_params(key, in_channels, hidden_dim, out_channels):
    eps = 1e-5
    ks = jax.random.split(key, 8)

    def lin(k, cin, cout):
        return jax.random.normal(k, (cin, cout), jnp.float32) * 0.1

    def bn_stats(k, c):
        k1, k2, k3, k4 = jax.random.split(k, 4)
        gamma = 1.0 + 0.05 * jax.random.normal(k1, (c,), jnp.float32)
        beta = 0.05 * jax.random.normal(k2, (c,), jnp.float32)
        mean = 0.05 * jax.random.normal(k3, (c,), jnp.float32)
        var = 1.0 + 0.05 * jnp.abs(jax.random.normal(k4, (c,), jnp.float32))
        return gamma, beta, mean, var

    def fold(W, stats):
        gamma, beta, mean, var = stats
        s = gamma / jnp.sqrt(var + eps)
        return W * s[None, :], (beta - mean * s)[None, :]

    H, OC = hidden_dim, out_channels
    w1, b1 = fold(lin(ks[0], in_channels, H), bn_stats(ks[1], H))   # pre_mlps
    w2, b2 = fold(lin(ks[2], 2 * H, H), bn_stats(ks[3], H))         # mlps layer 1
    w3, b3 = fold(lin(ks[4], H, H), bn_stats(ks[5], H))             # mlps layer 2
    w4 = lin(ks[6], H, H)                                           # out_mlps Linear 1
    b4 = 0.1 * jax.random.normal(jax.random.fold_in(ks[6], 1), (1, H), jnp.float32)
    w5 = lin(ks[7], H, OC)                                          # out_mlps Linear 2
    b5 = 0.1 * jax.random.normal(jax.random.fold_in(ks[7], 1), (1, OC), jnp.float32)
    return dict(w1=w1, b1=b1, w2=w2, b2=b2, w3=w3, b3=b3,
                w4=w4, b4=b4, w5=w5, b5=b5)


def reference(polylines, polylines_mask, p):
    """Pure-JAX f32 reference mirroring the PyTorch forward (eval-mode BN folded)."""
    m = polylines_mask.astype(jnp.float32)[..., None]                 # (B,P,N,1)
    h1 = jnp.maximum(polylines @ p["w1"] + p["b1"], 0.0) * m
    pooled1 = jnp.max(h1, axis=2, keepdims=True)
    cat = jnp.concatenate([h1, jnp.broadcast_to(pooled1, h1.shape)], axis=-1)
    h2 = jnp.maximum(cat @ p["w2"] + p["b2"], 0.0) * m
    h3 = jnp.maximum(h2 @ p["w3"] + p["b3"], 0.0) * m
    pooled2 = jnp.max(h3, axis=2)                                     # (B,P,H)
    valid = (jnp.sum(polylines_mask, axis=-1) > 0).astype(jnp.float32)[..., None]
    o1 = jnp.maximum(pooled2 @ p["w4"] + p["b4"], 0.0)
    return (o1 @ p["w5"] + p["b5"]) * valid


if __name__ == "__main__":
    B, P, N = 2, 4, 8
    in_channels, hidden_dim, out_channels = 4, 32, 128

    key = jax.random.PRNGKey(0)
    k_par, k_x, k_m = jax.random.split(key, 3)

    params = init_params(k_par, in_channels, hidden_dim, out_channels)
    polylines = jax.random.normal(k_x, (B, P, N, in_channels), jnp.float32)
    polylines_mask = jax.random.bernoulli(k_m, 0.7, (B, P, N))
    # make one polyline fully invalid to exercise the valid_mask path
    polylines_mask = polylines_mask.at[0, 0, :].set(False)

    out = pointnet_polyline_encoder(polylines, polylines_mask, params)
    out = jax.block_until_ready(out)

    ref = reference(polylines, polylines_mask, params)
    # bf16 matmul inputs vs f32 reference -> relaxed tolerances.
    np.testing.assert_allclose(np.asarray(out), np.asarray(ref), rtol=2e-2, atol=2e-2)
    assert out.shape == (B, P, out_channels)
    print("KERNEL_OK")
</pallas_src>

<mosaic_0001>
module attributes {stable_mosaic.version = 11 : i64} {
  func.func @pointnet_kernel(%arg0: i32, %arg1: memref<8x8x8xbf16, #tpu.memory_space<vmem>>, %arg2: memref<8x8x1xf32, #tpu.memory_space<vmem>>, %arg3: memref<136x32xbf16, #tpu.memory_space<vmem>>, %arg4: memref<32x128xbf16, #tpu.memory_space<vmem>>, %arg5: memref<8x32xf32, #tpu.memory_space<vmem>>, %arg6: memref<8x128xf32, #tpu.memory_space<vmem>>, %arg7: memref<8x128xf32, #tpu.memory_space<vmem>>) attributes {dimension_semantics = [#tpu.dimension_semantics<parallel>], iteration_bounds = array<i64: 1>, scalar_prefetch = 0 : i64, scratch_operands = 0 : i64, tpu.core_type = #tpu.core_type<tc>, window_params = [{transform_indices = @transform_0, window_bounds = array<i64: 8, 8, 8>}, {transform_indices = @transform_1, window_bounds = array<i64: 8, 8, 1>}, {pipeline_mode = #tpu.pipeline_mode<synchronous>, transform_indices = @transform_2, window_bounds = array<i64: 136, 32>}, {pipeline_mode = #tpu.pipeline_mode<synchronous>, transform_indices = @transform_3, window_bounds = array<i64: 32, 128>}, {pipeline_mode = #tpu.pipeline_mode<synchronous>, transform_indices = @transform_4, window_bounds = array<i64: 8, 32>}, {pipeline_mode = #tpu.pipeline_mode<synchronous>, transform_indices = @transform_5, window_bounds = array<i64: 8, 128>}, {transform_indices = @transform_6, window_bounds = array<i64: 8, 128>}]} {
    %c0 = arith.constant 0 : index
    %c0_0 = arith.constant 0 : index
    %c0_1 = arith.constant 0 : index
    %0 = vector.load %arg1[%c0, %c0_0, %c0_1] : memref<8x8x8xbf16, #tpu.memory_space<vmem>>, vector<8x8x8xbf16>
    %1 = vector.shape_cast %0 : vector<8x8x8xbf16> to vector<64x8xbf16>
    %c0_2 = arith.constant 0 : index
    %c0_3 = arith.constant 0 : index
    %c0_4 = arith.constant 0 : index
    %2 = vector.load %arg2[%c0_2, %c0_3, %c0_4] : memref<8x8x1xf32, #tpu.memory_space<vmem>>, vector<8x8x1xf32>
    %3 = vector.shape_cast %2 : vector<8x8x1xf32> to vector<64x1xf32>
    %c0_5 = arith.constant 0 : index
    %c0_6 = arith.constant 0 : index
    %4 = vector.load %arg3[%c0_5, %c0_6] : memref<136x32xbf16, #tpu.memory_space<vmem>>, vector<136x32xbf16>
    %5 = vector.extract_strided_slice %4 {offsets = [0, 0], sizes = [8, 32], strides = [1, 1]} : vector<136x32xbf16> to vector<8x32xbf16>
    %6 = vector.extract_strided_slice %4 {offsets = [8, 0], sizes = [32, 32], strides = [1, 1]} : vector<136x32xbf16> to vector<32x32xbf16>
    %7 = vector.extract_strided_slice %4 {offsets = [40, 0], sizes = [32, 32], strides = [1, 1]} : vector<136x32xbf16> to vector<32x32xbf16>
    %8 = vector.extract_strided_slice %4 {offsets = [72, 0], sizes = [32, 32], strides = [1, 1]} : vector<136x32xbf16> to vector<32x32xbf16>
    %9 = vector.extract_strided_slice %4 {offsets = [104, 0], sizes = [32, 32], strides = [1, 1]} : vector<136x32xbf16> to vector<32x32xbf16>
    %c0_7 = arith.constant 0 : index
    %c0_8 = arith.constant 0 : index
    %10 = vector.load %arg4[%c0_7, %c0_8] : memref<32x128xbf16, #tpu.memory_space<vmem>>, vector<32x128xbf16>
    %c0_9 = arith.constant 0 : index
    %c0_10 = arith.constant 0 : index
    %11 = vector.load %arg5[%c0_9, %c0_10] : memref<8x32xf32, #tpu.memory_space<vmem>>, vector<8x32xf32>
    %12 = vector.extract_strided_slice %11 {offsets = [0, 0], sizes = [1, 32], strides = [1, 1]} : vector<8x32xf32> to vector<1x32xf32>
    %13 = vector.extract_strided_slice %11 {offsets = [1, 0], sizes = [1, 32], strides = [1, 1]} : vector<8x32xf32> to vector<1x32xf32>
    %14 = vector.extract_strided_slice %11 {offsets = [2, 0], sizes = [1, 32], strides = [1, 1]} : vector<8x32xf32> to vector<1x32xf32>
    %15 = vector.extract_strided_slice %11 {offsets = [3, 0], sizes = [1, 32], strides = [1, 1]} : vector<8x32xf32> to vector<1x32xf32>
    %c0_11 = arith.constant 0 : index
    %c0_12 = arith.constant 0 : index
    %16 = vector.load %arg6[%c0_11, %c0_12] : memref<8x128xf32, #tpu.memory_space<vmem>>, vector<1x128xf32>
    %cst = arith.constant dense<0.000000e+00> : vector<64x32xf32>
    %17 = tpu.matmul %1, %5, %cst {dimension_numbers = #tpu.dot_dimension_numbers<[1], [0], [0], [1], [0, 0, 1, 1], [], []>} : vector<64x8xbf16>, vector<8x32xbf16>, vector<64x32xf32> -> vector<64x32xf32>
    %18 = vector.broadcast %12 : vector<1x32xf32> to vector<64x32xf32>
    %19 = arith.addf %17, %18 : vector<64x32xf32>
    %cst_13 = arith.constant 0.000000e+00 : f32
    %20 = vector.broadcast %cst_13 : f32 to vector<64x32xf32>
    %21 = arith.maximumf %19, %20 : vector<64x32xf32>
    %22 = vector.broadcast %3 : vector<64x1xf32> to vector<64x32xf32>
    %23 = arith.mulf %21, %22 : vector<64x32xf32>
    %24 = vector.shape_cast %23 : vector<64x32xf32> to vector<8x8x32xf32>
    %cst_14 = arith.constant dense<0xFF800000> : vector<8x32xf32>
    %25 = vector.multi_reduction <maximumf>, %24, %cst_14 [1] : vector<8x8x32xf32> to vector<8x32xf32>
    %26 = arith.truncf %25 : vector<8x32xf32> to vector<8x32xbf16>
    %cst_15 = arith.constant dense<0.000000e+00> : vector<8x32xf32>
    %27 = tpu.matmul %26, %7, %cst_15 {dimension_numbers = #tpu.dot_dimension_numbers<[1], [0], [0], [1], [0, 0, 1, 1], [], []>} : vector<8x32xbf16>, vector<32x32xbf16>, vector<8x32xf32> -> vector<8x32xf32>
    %28 = vector.shape_cast %27 : vector<8x32xf32> to vector<8x1x32xf32>
    %29 = vector.shape_cast %28 : vector<8x1x32xf32> to vector<8x1x32xf32>
    %30 = vector.broadcast %29 : vector<8x1x32xf32> to vector<8x8x32xf32>
    %31 = vector.shape_cast %30 : vector<8x8x32xf32> to vector<64x32xf32>
    %32 = arith.truncf %23 : vector<64x32xf32> to vector<64x32xbf16>
    %cst_16 = arith.constant dense<0.000000e+00> : vector<64x32xf32>
    %33 = tpu.matmul %32, %6, %cst_16 {dimension_numbers = #tpu.dot_dimension_numbers<[1], [0], [0], [1], [0, 0, 1, 1], [], []>} : vector<64x32xbf16>, vector<32x32xbf16>, vector<64x32xf32> -> vector<64x32xf32>
    %34 = arith.addf %33, %31 : vector<64x32xf32>
    %35 = vector.broadcast %13 : vector<1x32xf32> to vector<64x32xf32>
    %36 = arith.addf %34, %35 : vector<64x32xf32>
    %cst_17 = arith.constant 0.000000e+00 : f32
    %37 = vector.broadcast %cst_17 : f32 to vector<64x32xf32>
    %38 = arith.maximumf %36, %37 : vector<64x32xf32>
    %39 = vector.broadcast %3 : vector<64x1xf32> to vector<64x32xf32>
    %40 = arith.mulf %38, %39 : vector<64x32xf32>
    %41 = arith.truncf %40 : vector<64x32xf32> to vector<64x32xbf16>
    %cst_18 = arith.constant dense<0.000000e+00> : vector<64x32xf32>
    %42 = tpu.matmul %41, %8, %cst_18 {dimension_numbers = #tpu.dot_dimension_numbers<[1], [0], [0], [1], [0, 0, 1, 1], [], []>} : vector<64x32xbf16>, vector<32x32xbf16>, vector<64x32xf32> -> vector<64x32xf32>
    %43 = vector.broadcast %14 : vector<1x32xf32> to vector<64x32xf32>
    %44 = arith.addf %42, %43 : vector<64x32xf32>
    %cst_19 = arith.constant 0.000000e+00 : f32
    %45 = vector.broadcast %cst_19 : f32 to vector<64x32xf32>
    %46 = arith.maximumf %44, %45 : vector<64x32xf32>
    %47 = vector.broadcast %3 : vector<64x1xf32> to vector<64x32xf32>
    %48 = arith.mulf %46, %47 : vector<64x32xf32>
    %49 = vector.shape_cast %48 : vector<64x32xf32> to vector<8x8x32xf32>
    %cst_20 = arith.constant dense<0xFF800000> : vector<8x32xf32>
    %50 = vector.multi_reduction <maximumf>, %49, %cst_20 [1] : vector<8x8x32xf32> to vector<8x32xf32>
    %51 = arith.truncf %50 : vector<8x32xf32> to vector<8x32xbf16>
    %cst_21 = arith.constant dense<0.000000e+00> : vector<8x32xf32>
    %52 = tpu.matmul %51, %9, %cst_21 {dimension_numbers = #tpu.dot_dimension_numbers<[1], [0], [0], [1], [0, 0, 1, 1], [], []>} : vector<8x32xbf16>, vector<32x32xbf16>, vector<8x32xf32> -> vector<8x32xf32>
    %53 = vector.broadcast %15 : vector<1x32xf32> to vector<8x32xf32>
    %54 = arith.addf %52, %53 : vector<8x32xf32>
    %cst_22 = arith.constant 0.000000e+00 : f32
    %55 = vector.broadcast %cst_22 : f32 to vector<8x32xf32>
    %56 = arith.maximumf %54, %55 : vector<8x32xf32>
    %57 = arith.truncf %56 : vector<8x32xf32> to vector<8x32xbf16>
    %cst_23 = arith.constant dense<0.000000e+00> : vector<8x128xf32>
    %58 = tpu.matmul %57, %10, %cst_23 {dimension_numbers = #tpu.dot_dimension_numbers<[1], [0], [0], [1], [0, 0, 1, 1], [], []>} : vector<8x32xbf16>, vector<32x128xbf16>, vector<8x128xf32> -> vector<8x128xf32>
    %59 = vector.broadcast %16 : vector<1x128xf32> to vector<8x128xf32>
    %60 = arith.addf %58, %59 : vector<8x128xf32>
    %c0_24 = arith.constant 0 : index
    %c0_25 = arith.constant 0 : index
    %c0_26 = arith.constant 0 : index
    %61 = vector.load %arg2[%c0_24, %c0_25, %c0_26] : memref<8x8x1xf32, #tpu.memory_space<vmem>>, vector<8x8x1xf32>
    %cst_27 = arith.constant dense<0xFF800000> : vector<8x1xf32>
    %62 = vector.multi_reduction <maximumf>, %61, %cst_27 [1] : vector<8x8x1xf32> to vector<8x1xf32>
    %cst_28 = arith.constant 0.000000e+00 : f32
    %63 = vector.broadcast %cst_28 : f32 to vector<8x1xf32>
    %64 = arith.cmpf ogt, %62, %63 : vector<8x1xf32>
    %65 = arith.extui %64 : vector<8x1xi1> to vector<8x1xi32>
    %66 = arith.sitofp %65 : vector<8x1xi32> to vector<8x1xf32>
    %67 = vector.broadcast %66 : vector<8x1xf32> to vector<8x128xf32>
    %68 = arith.mulf %60, %67 : vector<8x128xf32>
    %c0_29 = arith.constant 0 : index
    %c0_30 = arith.constant 0 : index
    %69 = vector.load %arg7[%c0_29, %c0_30] : memref<8x128xf32, #tpu.memory_space<vmem>>, vector<8x128xf32>
    tpu.vector_store %arg7[%c0_29, %c0_30], %68 {strides = array<i32>} : memref<8x128xf32, #tpu.memory_space<vmem>>, vector<8x128xf32>,
    return
  }
  func.func @transform_0(%arg0: i32) -> (i32, i32, i32) {
    %c0_i32 = arith.constant 0 : i32
    %c0_i32_0 = arith.constant 0 : i32
    %c0_i32_1 = arith.constant 0 : i32
    return %arg0, %c0_i32, %c0_i32_0 : i32, i32, i32
  }
  func.func @transform_1(%arg0: i32) -> (i32, i32, i32) {
    %c0_i32 = arith.constant 0 : i32
    %c0_i32_0 = arith.constant 0 : i32
    %c0_i32_1 = arith.constant 0 : i32
    return %arg0, %c0_i32, %c0_i32_0 : i32, i32, i32
  }
  func.func @transform_2(%arg0: i32) -> (i32, i32) {
    %c0_i32 = arith.constant 0 : i32
    %c0_i32_0 = arith.constant 0 : i32
    %c0_i32_1 = arith.constant 0 : i32
    return %c0_i32, %c0_i32_0 : i32, i32
  }
  func.func @transform_3(%arg0: i32) -> (i32, i32) {
    %c0_i32 = arith.constant 0 : i32
    %c0_i32_0 = arith.constant 0 : i32
    %c0_i32_1 = arith.constant 0 : i32
    return %c0_i32, %c0_i32_0 : i32, i32
  }
  func.func @transform_4(%arg0: i32) -> (i32, i32) {
    %c0_i32 = arith.constant 0 : i32
    %c0_i32_0 = arith.constant 0 : i32
    %c0_i32_1 = arith.constant 0 : i32
    return %c0_i32, %c0_i32_0 : i32, i32
  }
  func.func @transform_5(%arg0: i32) -> (i32, i32) {
    %c0_i32 = arith.constant 0 : i32
    %c0_i32_0 = arith.constant 0 : i32
    %c0_i32_1 = arith.constant 0 : i32
    return %c0_i32, %c0_i32_0 : i32, i32
  }
  func.func @transform_6(%arg0: i32) -> (i32, i32) {
    %c0_i32 = arith.constant 0 : i32
    %c0_i32_0 = arith.constant 0 : i32
    return %arg0, %c0_i32 : i32, i32
  }
}

</mosaic_0001>

<llo_original>
// kernel: tpu_custom_call.1
$region0: #{tpu_custom_call.1}
  #allocation0 [shape = 'u32[]', space=smem, size = 0x4, offset = 0x4, fixed_abs, tag = 'smem constant byte address 0x4 - core index']
  #allocation1 [shape = 'u32[72,128]{1,0:T(1,128)}', space=vmem, size = 0x9000, scoped, tag = 'internal scratch']
  %s0 = inlined_call_operand.vmem [shape: bf16[8,8,8], index: 0, kind: input, shape index: {}]
  %s1 = inlined_call_operand.vmem [shape: f32[8,8,1], index: 1, kind: input, shape index: {}]
  %s2 = inlined_call_operand.vmem [shape: bf16[136,32], index: 2, kind: input, shape index: {}]
  %s3 = inlined_call_operand.vmem [shape: bf16[32,128], index: 3, kind: input, shape index: {}]
  %s4 = inlined_call_operand.vmem [shape: f32[8,32], index: 4, kind: input, shape index: {}]
  %s5 = inlined_call_operand.vmem [shape: f32[8,128], index: 5, kind: input, shape index: {}]
  %s6 = inlined_call_operand.hbm [shape: f32[8,128], index: 6, kind: output, shape index: {}]
  %s7 = sld [smem:[#allocation0]]
  $region34: #{tpu_custom_call.1} parent=0
    _
  %s9 = ssub.s32 1, %s7
  %s10 = scalar_select 0, %s9, %s7
  $region1: #{tpu_custom_call.1} parent=0
    #allocation2 [shape = 'u8[4096]{0}', space=vmem, size = 0x1000, scoped, tag = 'output window, operand 0, single buffered']
    #allocation3 [shape = 's32[1]{0}', space=sflag, size = 0x4, scoped, tag = 'scoped memory for tpu_custom_call.1']
    %11 = vsyncpa [#allocation3], 0
    // Predicated region
    $region2: #{tpu_custom_call.1} parent=1 // pred_check
      _
    $region3: #{tpu_custom_call.1} parent=1 // pred_check_branch
      %13 = sbr.rel (0) target = $region5
    $region4: #{tpu_custom_call.1} parent=1 // pred_region
      _
    $region5: #{tpu_custom_call.1} parent=1 // pred_fallthru
      _
    // Predicated region
    $region6: #{tpu_custom_call.1} parent=1 // pred_check
      _
    $region7: #{tpu_custom_call.1} parent=1 // pred_check_branch
      %15 = sbr.rel (0) target = $region9
    $region8: #{tpu_custom_call.1} parent=1 // pred_region
      _
    $region9: #{tpu_custom_call.1} parent=1 // pred_fallthru
      _
    // Predicated region
    $region10: #{tpu_custom_call.1} parent=1 // pred_check
      _
    $region11: #{tpu_custom_call.1} parent=1 // pred_check_branch
      %17 = sbr.rel (0) target = $region13
    $region12: #{tpu_custom_call.1} parent=1 // pred_region
      _
    $region13: #{tpu_custom_call.1} parent=1 // pred_fallthru
      _
    // Predicated region
    $region14: #{tpu_custom_call.1} parent=1 // pred_check
      _
    $region15: #{tpu_custom_call.1} parent=1 // pred_check_branch
      %19 = sbr.rel (0) target = $region17
    $region16: #{tpu_custom_call.1} parent=1 // pred_region
      _
    $region17: #{tpu_custom_call.1} parent=1 // pred_fallthru
      _
    // Predicated region
    $region18: #{tpu_custom_call.1} parent=1 // pred_check
      _
    $region19: #{tpu_custom_call.1} parent=1 // pred_check_branch
      %21 = sbr.rel (0) target = $region21
    $region20: #{tpu_custom_call.1} parent=1 // pred_region
      _
    $region21: #{tpu_custom_call.1} parent=1 // pred_fallthru
      _
    // Predicated region
    $region22: #{tpu_custom_call.1} parent=1 // pred_check
      _
    $region23: #{tpu_custom_call.1} parent=1 // pred_check_branch
      %23 = sbr.rel (0) target = $region25
    $region24: #{tpu_custom_call.1} parent=1 // pred_region
      _
    $region25: #{tpu_custom_call.1} parent=1 // pred_fallthru
      _
    %v25 = vld [vmem:[%s0] sm:$0xf]
    %v26 = vld [vmem:[%s0 + $0x4] sm:$0xf]
    %v27 = vld [vmem:[%s0 + $0x8] sm:$0xf]
    %v28 = vld [vmem:[%s0 + $0xc] sm:$0xf]
    %v29 = vld [vmem:[%s0 + $0x10] sm:$0xf]
    %v30 = vld [vmem:[%s0 + $0x14] sm:$0xf]
    %v31 = vld [vmem:[%s0 + $0x18] sm:$0xf]
    %v32 = vld [vmem:[%s0 + $0x1c] sm:$0xf]
    %v33 = vld [vmem:[%s1] sm:$0xff]
    %v34 = vld [vmem:[%s1 + $0x8] sm:$0xff]
    %v35 = vld [vmem:[%s1 + $0x10] sm:$0xff]
    %v36 = vld [vmem:[%s1 + $0x18] sm:$0xff]
    %v37 = vld [vmem:[%s1 + $0x20] sm:$0xff]
    %v38 = vld [vmem:[%s1 + $0x28] sm:$0xff]
    %v39 = vld [vmem:[%s1 + $0x30] sm:$0xff]
    %v40 = vld [vmem:[%s1 + $0x38] sm:$0xff]
    %v41 = vld [vmem:[%s2] sm:$0xf]
    %v42 = vld [vmem:[%s2 + $0x4] sm:$0xf]
    %v43 = vld [vmem:[%s2 + $0x8] sm:$0xf]
    %v44 = vld [vmem:[%s2 + $0xc] sm:$0xf]
    %v45 = vld [vmem:[%s2 + $0x10] sm:$0xf]
    %v46 = vld [vmem:[%s2 + $0x14] sm:$0xf]
    %v47 = vld [vmem:[%s2 + $0x18] sm:$0xf]
    %v48 = vld [vmem:[%s2 + $0x1c] sm:$0xf]
    %v49 = vld [vmem:[%s2 + $0x20] sm:$0xf]
    %v50 = vld [vmem:[%s2 + $0x24] sm:$0xf]
    %v51 = vld [vmem:[%s2 + $0x28] sm:$0xf]
    %v52 = vld [vmem:[%s2 + $0x2c] sm:$0xf]
    %v53 = vld [vmem:[%s2 + $0x30] sm:$0xf]
    %v54 = vld [vmem:[%s2 + $0x34] sm:$0xf]
    %v55 = vld [vmem:[%s2 + $0x38] sm:$0xf]
    %v56 = vld [vmem:[%s2 + $0x3c] sm:$0xf]
    %v57 = vld [vmem:[%s2 + $0x40] sm:$0xf]
    %v58 = vld [vmem:[%s3] sm:$0xf]
    %v59 = vld [vmem:[%s3 + $0x4] sm:$0xf]
    %v60 = vld [vmem:[%s3 + $0x8] sm:$0xf]
    %v61 = vld [vmem:[%s3 + $0xc] sm:$0xf]
    %v62 = vld [vmem:[%s4] sm:$0xff]
    %v63 = vld [vmem:[%s5] sm:$0x1]
    %v64 = vperm.slane %v62, 0
    %v73 = vunpack.c.l.b16 %v25
    %v74 = vunpack.c.l.b16 %v26
    %v75 = vunpack.c.l.b16 %v27
    %v76 = vunpack.c.l.b16 %v28
    %v77 = vunpack.c.l.b16 %v29
    %v78 = vunpack.c.l.b16 %v30
    %v79 = vunpack.c.l.b16 %v31
    %v80 = vunpack.c.l.b16 %v32
    %v81 = vpack.c.b16 %v74, %v73
    %v82 = vpack.c.b16 %v76, %v75
    %v83 = vpack.c.b16 %v78, %v77
    %v84 = vpack.c.b16 %v80, %v79
    %vm85 = vcmask 64512
    %v87 = vsel %vm85, %v81, 0
    %v90 = vsel %vm85, %v82, 0
    %v93 = vsel %vm85, %v83, 0
    %v96 = vsel %vm85, %v84, 0
    %vm98 = vcmask 1043456
    %v100 = vsel %vm98, %v41, 0
    %102 = vmatpush.bf16.msra.mxu0 0
    %103 = vmatpush.bf16.msra.mxu0 0
    %104 = vmatpush.bf16.msra.mxu0 0
    %105 = vmatpush.bf16.msra.mxu0 0
    %106 = vmatpush.bf16.msra.mxu0 0
    %107 = vmatpush.bf16.msra.mxu0 0
    %108 = vmatpush.bf16.msra.mxu0 0
    %109 = vmatpush.bf16.msra.mxu0 %v100
    %110 = vmatmul.bf16.gmra.mxu0 %v87
    %v111 = vpop.f32.mrf.mxu0
    %v112 = vadd.f32 %v64, %v111
    %v113 = vpop.f32.mrf.mxu0
    %v114 = vadd.f32 %v64, %v113
    %115 = vmatmul.bf16.gmra.mxu0 %v90
    %v116 = vpop.f32.mrf.mxu0
    %v117 = vadd.f32 %v64, %v116
    %v118 = vpop.f32.mrf.mxu0
    %v119 = vadd.f32 %v64, %v118
    %120 = vmatmul.bf16.gmra.mxu0 %v93
    %v121 = vpop.f32.mrf.mxu0
    %v122 = vadd.f32 %v64, %v121
    %v123 = vpop.f32.mrf.mxu0
    %v124 = vadd.f32 %v64, %v123
    %125 = vmatmul.bf16.gmra.mxu0 %v96
    %v126 = vpop.f32.mrf.mxu0
    %v127 = vadd.f32 %v64, %v126
    %v128 = vpop.f32.mrf.mxu0
    %v129 = vadd.f32 %v64, %v128
    %130 = vdwg.mxu0
    %v131 = vmax.f32 %v112, 0.0
    %v132 = vmax.f32 %v114, 0.0
    %v133 = vmax.f32 %v117, 0.0
    %v134 = vmax.f32 %v119, 0.0
    %v135 = vmax.f32 %v122, 0.0
    %v136 = vmax.f32 %v124, 0.0
    %v137 = vmax.f32 %v127, 0.0
    %v138 = vmax.f32 %v129, 0.0
    %140 = vset.pattern.permute.xlu0 0
    %141 = vperm.xlu0 %140, %v33
    %v142 = vpop.permute.xlu0 %141
    %145 = vset.pattern.permute.xlu0 0
    %146 = vperm.xlu0 %145, %v34
    %v147 = vpop.permute.xlu0 %146
    %150 = vset.pattern.permute.xlu0 0
    %151 = vperm.xlu0 %150, %v35
    %v152 = vpop.permute.xlu0 %151
    %155 = vset.pattern.permute.xlu0 0
    %156 = vperm.xlu0 %155, %v36
    %v157 = vpop.permute.xlu0 %156
    %160 = vset.pattern.permute.xlu0 0
    %161 = vperm.xlu0 %160, %v37
    %v162 = vpop.permute.xlu0 %161
    %165 = vset.pattern.permute.xlu0 0
    %166 = vperm.xlu0 %165, %v38
    %v167 = vpop.permute.xlu0 %166
    %170 = vset.pattern.permute.xlu0 0
    %171 = vperm.xlu0 %170, %v39
    %v172 = vpop.permute.xlu0 %171
    %175 = vset.pattern.permute.xlu0 0
    %176 = vperm.xlu0 %175, %v40
    %v177 = vpop.permute.xlu0 %176
    %v179 = vmul.f32 %v131, %v142
    %v180 = vmul.f32 %v132, %v147
    %v181 = vmul.f32 %v133, %v152
    %v182 = vmul.f32 %v134, %v157
    %v183 = vmul.f32 %v135, %v162
    %v184 = vmul.f32 %v136, %v167
    %v185 = vmul.f32 %v137, %v172
    %v186 = vmul.f32 %v138, %v177
    %vm187 = vcmask 261120
    %v188 = vsel %vm187, %v179, -inf
    %v189 = vrot.slane %v188, 4
    %v190 = vmax.f32 %v188, %v189
    %v191 = vrot.slane %v190, 2
    %v192 = vmax.f32 %v190, %v191
    %v193 = vrot.slane %v192, 1
    %v194 = vmax.f32 %v192, %v193
    %v195 = vsel %vm187, %v180, -inf
    %v196 = vrot.slane %v195, 4
    %v197 = vmax.f32 %v195, %v196
    %v198 = vrot.slane %v197, 2
    %v199 = vmax.f32 %v197, %v198
    %v200 = vrot.slane %v199, 1
    %v201 = vmax.f32 %v199, %v200
    %v202 = vsel %vm187, %v181, -inf
    %v203 = vrot.slane %v202, 4
    %v204 = vmax.f32 %v202, %v203
    %v205 = vrot.slane %v204, 2
    %v206 = vmax.f32 %v204, %v205
    %v207 = vrot.slane %v206, 1
    %v208 = vmax.f32 %v206, %v207
    %v209 = vsel %vm187, %v182, -inf
    %v210 = vrot.slane %v209, 4
    %v211 = vmax.f32 %v209, %v210
    %v212 = vrot.slane %v211, 2
    %v213 = vmax.f32 %v211, %v212
    %v214 = vrot.slane %v213, 1
    %v215 = vmax.f32 %v213, %v214
    %v216 = vsel %vm187, %v183, -inf
    %v217 = vrot.slane %v216, 4
    %v218 = vmax.f32 %v216, %v217
    %v219 = vrot.slane %v218, 2
    %v220 = vmax.f32 %v218, %v219
    %v221 = vrot.slane %v220, 1
    %v222 = vmax.f32 %v220, %v221
    %v223 = vsel %vm187, %v184, -inf
    %v224 = vrot.slane %v223, 4
    %v225 = vmax.f32 %v223, %v224
    %v226 = vrot.slane %v225, 2
    %v227 = vmax.f32 %v225, %v226
    %v228 = vrot.slane %v227, 1
    %v229 = vmax.f32 %v227, %v228
    %v230 = vsel %vm187, %v185, -inf
    %v231 = vrot.slane %v230, 4
    %v232 = vmax.f32 %v230, %v231
    %v233 = vrot.slane %v232, 2
    %v234 = vmax.f32 %v232, %v233
    %v235 = vrot.slane %v234, 1
    %v236 = vmax.f32 %v234, %v235
    %v237 = vsel %vm187, %v186, -inf
    %v238 = vrot.slane %v237, 4
    %v239 = vmax.f32 %v237, %v238
    %v240 = vrot.slane %v239, 2
    %v241 = vmax.f32 %v239, %v240
    %v242 = vrot.slane %v241, 1
    %v243 = vmax.f32 %v241, %v242
    %v244 = vpack.c.bf16 %v194, %v194
    %v245 = vpack.c.bf16 %v201, %v201
    %v246 = vpack.c.bf16 %v208, %v208
    %v247 = vpack.c.bf16 %v215, %v215
    %v248 = vpack.c.bf16 %v222, %v222
    %v249 = vpack.c.bf16 %v229, %v229
    %v250 = vpack.c.bf16 %v236, %v236
    %v251 = vpack.c.bf16 %v243, %v243
    %v260 = vunpack.c.l.b16 %v244
    %v261 = vunpack.c.l.b16 %v245
    %v262 = vunpack.c.l.b16 %v246
    %v263 = vunpack.c.l.b16 %v247
    %v264 = vunpack.c.l.b16 %v248
    %v265 = vunpack.c.l.b16 %v249
    %v266 = vunpack.c.l.b16 %v250
    %v267 = vunpack.c.l.b16 %v251
    %vm268 = vcmask 1041409
    %v269 = vsel %vm268, %v261, %v260
    %vm270 = vcmask 1042434
    %v271 = vsel %vm270, %v262, %v269
    %vm272 = vcmask 1043459
    %v273 = vsel %vm272, %v263, %v271
    %vm274 = vcmask 1044484
    %v275 = vsel %vm274, %v264, %v273
    %vm276 = vcmask 1045509
    %v277 = vsel %vm276, %v265, %v275
    %vm278 = vcmask 1046534
    %v279 = vsel %vm278, %v266, %v277
    %vm280 = vcmask 1047559
    %v281 = vsel %vm280, %v267, %v279
    %v282 = vpack.c.b16 %v281, %v281
    %v287 = vunpack.c.l.b16 %v46
    %v288 = vunpack.c.l.b16 %v47
    %v289 = vunpack.c.l.b16 %v48
    %v290 = vunpack.c.l.b16 %v49
    %v291 = vpack.c.b16 %v288, %v287
    %v292 = vpack.c.b16 %v290, %v289
    %v296 = vsel %vm187, %v282, 0
    %298 = vmatpush.bf16.msra.mxu0 0
    %299 = vmatpush.bf16.msra.mxu0 0
    %300 = vmatpush.bf16.msra.mxu0 0
    %301 = vmatpush.bf16.msra.mxu0 0
    %302 = vmatpush.bf16.msra.mxu0 0
    %303 = vmatpush.bf16.msra.mxu0 0
    %304 = vmatpush.bf16.msra.mxu0 %v292
    %305 = vmatpush.bf16.msra.mxu0 %v291
    %306 = vmatmul.bf16.gmra.mxu0 %v296
    %v307 = vpop.f32.mrf.mxu0
    %v308 = vadd.f32 0.0, %v307
    %v309 = vpop.f32.mrf.mxu0
    %310 = vdwg.mxu0
    %v312 = vrot.slane %v308, 1
    %v313 = vrot.slane %v308, 2
    %v314 = vrot.slane %v308, 3
    %v315 = vrot.slane %v308, 4
    %v316 = vrot.slane %v308, 5
    %v317 = vrot.slane %v308, 6
    %v318 = vrot.slane %v308, 7
    %v319 = vperm.slane %v308, 0
    %v320 = vperm.slane %v312, 0
    %v321 = vperm.slane %v313, 0
    %v322 = vperm.slane %v314, 0
    %v323 = vperm.slane %v315, 0
    %v324 = vperm.slane %v316, 0
    %v325 = vperm.slane %v317, 0
    %v326 = vperm.slane %v318, 0
    %v335 = vpack.c.bf16 %v180, %v179
    %v336 = vpack.c.bf16 %v182, %v181
    %v337 = vpack.c.bf16 %v184, %v183
    %v338 = vpack.c.bf16 %v186, %v185
    %v343 = vunpack.c.l.b16 %v42
    %v344 = vunpack.c.l.b16 %v43
    %v345 = vunpack.c.l.b16 %v44
    %v346 = vunpack.c.l.b16 %v45
    %v347 = vpack.c.b16 %v344, %v343
    %v348 = vpack.c.b16 %v346, %v345
    %v352 = vsel %vm187, %v335, 0
    %v355 = vsel %vm187, %v336, 0
    %v358 = vsel %vm187, %v337, 0
    %v361 = vsel %vm187, %v338, 0
    %363 = vmatpush.bf16.msra.mxu0 0
    %364 = vmatpush.bf16.msra.mxu0 0
    %365 = vmatpush.bf16.msra.mxu0 0
    %366 = vmatpush.bf16.msra.mxu0 0
    %367 = vmatpush.bf16.msra.mxu0 0
    %368 = vmatpush.bf16.msra.mxu0 0
    %369 = vmatpush.bf16.msra.mxu0 %v348
    %370 = vmatpush.bf16.msra.mxu0 %v347
    %371 = vmatmul.bf16.gmra.mxu0 %v352
    %v372 = vpop.f32.mrf.mxu0
    %v373 = vadd.f32 %v319, %v372
    %v374 = vpop.f32.mrf.mxu0
    %v375 = vadd.f32 %v320, %v374
    %376 = vmatmul.bf16.gmra.mxu0 %v355
    %v377 = vpop.f32.mrf.mxu0
    %v378 = vadd.f32 %v321, %v377
    %v379 = vpop.f32.mrf.mxu0
    %v380 = vadd.f32 %v322, %v379
    %381 = vmatmul.bf16.gmra.mxu0 %v358
    %v382 = vpop.f32.mrf.mxu0
    %v383 = vadd.f32 %v323, %v382
    %v384 = vpop.f32.mrf.mxu0
    %v385 = vadd.f32 %v324, %v384
    %386 = vmatmul.bf16.gmra.mxu0 %v361
    %v387 = vpop.f32.mrf.mxu0
    %v388 = vadd.f32 %v325, %v387
    %v389 = vpop.f32.mrf.mxu0
    %v390 = vadd.f32 %v326, %v389
    %391 = vdwg.mxu0
    %v392 = vperm.slane %v62, 1
    %v393 = vadd.f32 %v373, %v392
    %v394 = vadd.f32 %v375, %v392
    %v395 = vadd.f32 %v378, %v392
    %v396 = vadd.f32 %v380, %v392
    %v397 = vadd.f32 %v383, %v392
    %v398 = vadd.f32 %v385, %v392
    %v399 = vadd.f32 %v388, %v392
    %v400 = vadd.f32 %v390, %v392
    %v401 = vmax.f32 %v393, 0.0
    %v402 = vmax.f32 %v394, 0.0
    %v403 = vmax.f32 %v395, 0.0
    %v404 = vmax.f32 %v396, 0.0
    %v405 = vmax.f32 %v397, 0.0
    %v406 = vmax.f32 %v398, 0.0
    %v407 = vmax.f32 %v399, 0.0
    %v408 = vmax.f32 %v400, 0.0
    %v409 = vmul.f32 %v401, %v142
    %v410 = vmul.f32 %v402, %v147
    %v411 = vmul.f32 %v403, %v152
    %v412 = vmul.f32 %v404, %v157
    %v413 = vmul.f32 %v405, %v162
    %v414 = vmul.f32 %v406, %v167
    %v415 = vmul.f32 %v407, %v172
    %v416 = vmul.f32 %v408, %v177
    %v417 = vpack.c.bf16 %v410, %v409
    %v418 = vpack.c.bf16 %v412, %v411
    %v419 = vpack.c.bf16 %v414, %v413
    %v420 = vpack.c.bf16 %v416, %v415
    %v421 = vperm.slane %v62, 2
    %v426 = vunpack.c.l.b16 %v50
    %v427 = vunpack.c.l.b16 %v51
    %v428 = vunpack.c.l.b16 %v52
    %v429 = vunpack.c.l.b16 %v53
    %v430 = vpack.c.b16 %v427, %v426
    %v431 = vpack.c.b16 %v429, %v428
    %v435 = vsel %vm187, %v417, 0
    %v438 = vsel %vm187, %v418, 0
    %v441 = vsel %vm187, %v419, 0
    %v444 = vsel %vm187, %v420, 0
    %446 = vmatpush.bf16.msra.mxu0 0
    %447 = vmatpush.bf16.msra.mxu0 0
    %448 = vmatpush.bf16.msra.mxu0 0
    %449 = vmatpush.bf16.msra.mxu0 0
    %450 = vmatpush.bf16.msra.mxu0 0
    %451 = vmatpush.bf16.msra.mxu0 0
    %452 = vmatpush.bf16.msra.mxu0 %v431
    %453 = vmatpush.bf16.msra.mxu0 %v430
    %454 = vmatmul.bf16.gmra.mxu0 %v435
    %v455 = vpop.f32.mrf.mxu0
    %v456 = vadd.f32 %v421, %v455
    %v457 = vpop.f32.mrf.mxu0
    %v458 = vadd.f32 %v421, %v457
    %459 = vmatmul.bf16.gmra.mxu0 %v438
    %v460 = vpop.f32.mrf.mxu0
    %v461 = vadd.f32 %v421, %v460
    %v462 = vpop.f32.mrf.mxu0
    %v463 = vadd.f32 %v421, %v462
    %464 = vmatmul.bf16.gmra.mxu0 %v441
    %v465 = vpop.f32.mrf.mxu0
    %v466 = vadd.f32 %v421, %v465
    %v467 = vpop.f32.mrf.mxu0
    %v468 = vadd.f32 %v421, %v467
    %469 = vmatmul.bf16.gmra.mxu0 %v444
    %v470 = vpop.f32.mrf.mxu0
    %v471 = vadd.f32 %v421, %v470
    %v472 = vpop.f32.mrf.mxu0
    %v473 = vadd.f32 %v421, %v472
    %474 = vdwg.mxu0
    %v475 = vmax.f32 %v456, 0.0
    %v476 = vmax.f32 %v458, 0.0
    %v477 = vmax.f32 %v461, 0.0
    %v478 = vmax.f32 %v463, 0.0
    %v479 = vmax.f32 %v466, 0.0
    %v480 = vmax.f32 %v468, 0.0
    %v481 = vmax.f32 %v471, 0.0
    %v482 = vmax.f32 %v473, 0.0
    %v483 = vmul.f32 %v475, %v142
    %v484 = vmul.f32 %v476, %v147
    %v485 = vmul.f32 %v477, %v152
    %v486 = vmul.f32 %v478, %v157
    %v487 = vmul.f32 %v479, %v162
    %v488 = vmul.f32 %v480, %v167
    %v489 = vmul.f32 %v481, %v172
    %v490 = vmul.f32 %v482, %v177
    %v491 = vsel %vm187, %v483, -inf
    %v492 = vrot.slane %v491, 4
    %v493 = vmax.f32 %v491, %v492
    %v494 = vrot.slane %v493, 2
    %v495 = vmax.f32 %v493, %v494
    %v496 = vrot.slane %v495, 1
    %v497 = vmax.f32 %v495, %v496
    %v498 = vsel %vm187, %v484, -inf
    %v499 = vrot.slane %v498, 4
    %v500 = vmax.f32 %v498, %v499
    %v501 = vrot.slane %v500, 2
    %v502 = vmax.f32 %v500, %v501
    %v503 = vrot.slane %v502, 1
    %v504 = vmax.f32 %v502, %v503
    %v505 = vsel %vm187, %v485, -inf
    %v506 = vrot.slane %v505, 4
    %v507 = vmax.f32 %v505, %v506
    %v508 = vrot.slane %v507, 2
    %v509 = vmax.f32 %v507, %v508
    %v510 = vrot.slane %v509, 1
    %v511 = vmax.f32 %v509, %v510
    %v512 = vsel %vm187, %v486, -inf
    %v513 = vrot.slane %v512, 4
    %v514 = vmax.f32 %v512, %v513
    %v515 = vrot.slane %v514, 2
    %v516 = vmax.f32 %v514, %v515
    %v517 = vrot.slane %v516, 1
    %v518 = vmax.f32 %v516, %v517
    %v519 = vsel %vm187, %v487, -inf
    %v520 = vrot.slane %v519, 4
    %v521 = vmax.f32 %v519, %v520
    %v522 = vrot.slane %v521, 2
    %v523 = vmax.f32 %v521, %v522
    %v524 = vrot.slane %v523, 1
    %v525 = vmax.f32 %v523, %v524
    %v526 = vsel %vm187, %v488, -inf
    %v527 = vrot.slane %v526, 4
    %v528 = vmax.f32 %v526, %v527
    %v529 = vrot.slane %v528, 2
    %v530 = vmax.f32 %v528, %v529
    %v531 = vrot.slane %v530, 1
    %v532 = vmax.f32 %v530, %v531
    %v533 = vsel %vm187, %v489, -inf
    %v534 = vrot.slane %v533, 4
    %v535 = vmax.f32 %v533, %v534
    %v536 = vrot.slane %v535, 2
    %v537 = vmax.f32 %v535, %v536
    %v538 = vrot.slane %v537, 1
    %v539 = vmax.f32 %v537, %v538
    %v540 = vsel %vm187, %v490, -inf
    %v541 = vrot.slane %v540, 4
    %v542 = vmax.f32 %v540, %v541
    %v543 = vrot.slane %v542, 2
    %v544 = vmax.f32 %v542, %v543
    %v545 = vrot.slane %v544, 1
    %v546 = vmax.f32 %v544, %v545
    %v547 = vpack.c.bf16 %v497, %v497
    %v548 = vpack.c.bf16 %v504, %v504
    %v549 = vpack.c.bf16 %v511, %v511
    %v550 = vpack.c.bf16 %v518, %v518
    %v551 = vpack.c.bf16 %v525, %v525
    %v552 = vpack.c.bf16 %v532, %v532
    %v553 = vpack.c.bf16 %v539, %v539
    %v554 = vpack.c.bf16 %v546, %v546
    %v555 = vperm.slane %v62, 3
    %v564 = vunpack.c.l.b16 %v547
    %v565 = vunpack.c.l.b16 %v548
    %v566 = vunpack.c.l.b16 %v549
    %v567 = vunpack.c.l.b16 %v550
    %v568 = vunpack.c.l.b16 %v551
    %v569 = vunpack.c.l.b16 %v552
    %v570 = vunpack.c.l.b16 %v553
    %v571 = vunpack.c.l.b16 %v554
    %v572 = vsel %vm268, %v565, %v564
    %v573 = vsel %vm270, %v566, %v572
    %v574 = vsel %vm272, %v567, %v573
    %v575 = vsel %vm274, %v568, %v574
    %v576 = vsel %vm276, %v569, %v575
    %v577 = vsel %vm278, %v570, %v576
    %v578 = vsel %vm280, %v571, %v577
    %v579 = vpack.c.b16 %v578, %v578
    %v584 = vunpack.c.l.b16 %v54
    %v585 = vunpack.c.l.b16 %v55
    %v586 = vunpack.c.l.b16 %v56
    %v587 = vunpack.c.l.b16 %v57
    %v588 = vpack.c.b16 %v585, %v584
    %v589 = vpack.c.b16 %v587, %v586
    %v593 = vsel %vm187, %v579, 0
    %595 = vmatpush.bf16.msra.mxu0 0
    %596 = vmatpush.bf16.msra.mxu0 0
    %597 = vmatpush.bf16.msra.mxu0 0
    %598 = vmatpush.bf16.msra.mxu0 0
    %599 = vmatpush.bf16.msra.mxu0 0
    %600 = vmatpush.bf16.msra.mxu0 0
    %601 = vmatpush.bf16.msra.mxu0 %v589
    %602 = vmatpush.bf16.msra.mxu0 %v588
    %603 = vmatmul.bf16.gmra.mxu0 %v593
    %v604 = vpop.f32.mrf.mxu0
    %v605 = vadd.f32 %v555, %v604
    %v606 = vpop.f32.mrf.mxu0
    %607 = vdwg.mxu0
    %v608 = vmax.f32 %v605, 0.0
    %v609 = vpack.c.bf16 %v608, %v608
    %v610 = vperm.slane %v63, 0
    %v615 = vunpack.c.l.b16 %v58
    %v616 = vunpack.c.l.b16 %v59
    %v617 = vunpack.c.l.b16 %v60
    %v618 = vunpack.c.l.b16 %v61
    %v619 = vpack.c.b16 %v616, %v615
    %v620 = vpack.c.b16 %v618, %v617
    %v624 = vsel %vm187, %v609, 0
    %626 = vmatpush.bf16.msra.mxu0 0
    %627 = vmatpush.bf16.msra.mxu0 0
    %628 = vmatpush.bf16.msra.mxu0 0
    %629 = vmatpush.bf16.msra.mxu0 0
    %630 = vmatpush.bf16.msra.mxu0 0
    %631 = vmatpush.bf16.msra.mxu0 0
    %632 = vmatpush.bf16.msra.mxu0 %v620
    %633 = vmatpush.bf16.msra.mxu0 %v619
    %634 = vmatmul.bf16.gmra.mxu0 %v624
    %v635 = vpop.f32.mrf.mxu0
    %v636 = vadd.f32 %v610, %v635
    %v637 = vpop.f32.mrf.mxu0
    %638 = vdwg.mxu0
    %vm639 = vcmask 7168
    %v640 = vsel %vm639, %v33, -inf
    %v641 = vrot.slane %v640, 4
    %v642 = vmax.f32 %v640, %v641
    %v643 = vrot.slane %v642, 2
    %v644 = vmax.f32 %v642, %v643
    %v645 = vrot.slane %v644, 1
    %v646 = vmax.f32 %v644, %v645
    %v647 = vsel %vm639, %v34, -inf
    %v648 = vrot.slane %v647, 4
    %v649 = vmax.f32 %v647, %v648
    %v650 = vrot.slane %v649, 2
    %v651 = vmax.f32 %v649, %v650
    %v652 = vrot.slane %v651, 1
    %v653 = vmax.f32 %v651, %v652
    %v654 = vsel %vm639, %v35, -inf
    %v655 = vrot.slane %v654, 4
    %v656 = vmax.f32 %v654, %v655
    %v657 = vrot.slane %v656, 2
    %v658 = vmax.f32 %v656, %v657
    %v659 = vrot.slane %v658, 1
    %v660 = vmax.f32 %v658, %v659
    %v661 = vsel %vm639, %v36, -inf
    %v662 = vrot.slane %v661, 4
    %v663 = vmax.f32 %v661, %v662
    %v664 = vrot.slane %v663, 2
    %v665 = vmax.f32 %v663, %v664
    %v666 = vrot.slane %v665, 1
    %v667 = vmax.f32 %v665, %v666
    %v668 = vsel %vm639, %v37, -inf
    %v669 = vrot.slane %v668, 4
    %v670 = vmax.f32 %v668, %v669
    %v671 = vrot.slane %v670, 2
    %v672 = vmax.f32 %v670, %v671
    %v673 = vrot.slane %v672, 1
    %v674 = vmax.f32 %v672, %v673
    %v675 = vsel %vm639, %v38, -inf
    %v676 = vrot.slane %v675, 4
    %v677 = vmax.f32 %v675, %v676
    %v678 = vrot.slane %v677, 2
    %v679 = vmax.f32 %v677, %v678
    %v680 = vrot.slane %v679, 1
    %v681 = vmax.f32 %v679, %v680
    %v682 = vsel %vm639, %v39, -inf
    %v683 = vrot.slane %v682, 4
    %v684 = vmax.f32 %v682, %v683
    %v685 = vrot.slane %v684, 2
    %v686 = vmax.f32 %v684, %v685
    %v687 = vrot.slane %v686, 1
    %v688 = vmax.f32 %v686, %v687
    %v689 = vsel %vm639, %v40, -inf
    %v690 = vrot.slane %v689, 4
    %v691 = vmax.f32 %v689, %v690
    %v692 = vrot.slane %v691, 2
    %v693 = vmax.f32 %v691, %v692
    %v694 = vrot.slane %v693, 1
    %v695 = vmax.f32 %v693, %v694
    %vm696 = vcmp.gt.f32.partialorder %v646, 0.0
    %vm697 = vcmp.gt.f32.partialorder %v653, 0.0
    %vm698 = vcmp.gt.f32.partialorder %v660, 0.0
    %vm699 = vcmp.gt.f32.partialorder %v667, 0.0
    %vm700 = vcmp.gt.f32.partialorder %v674, 0.0
    %vm701 = vcmp.gt.f32.partialorder %v681, 0.0
    %vm702 = vcmp.gt.f32.partialorder %v688, 0.0
    %vm703 = vcmp.gt.f32.partialorder %v695, 0.0
    %v704 = vsel %vm696, 1, 0
    %v705 = vsel %vm697, 1, 0
    %v706 = vsel %vm698, 1, 0
    %v707 = vsel %vm699, 1, 0
    %v708 = vsel %vm700, 1, 0
    %v709 = vsel %vm701, 1, 0
    %v710 = vsel %vm702, 1, 0
    %v711 = vsel %vm703, 1, 0
    %v712 = vcvt.s32.f32 %v704
    %v713 = vcvt.s32.f32 %v705
    %v714 = vcvt.s32.f32 %v706
    %v715 = vcvt.s32.f32 %v707
    %v716 = vcvt.s32.f32 %v708
    %v717 = vcvt.s32.f32 %v709
    %v718 = vcvt.s32.f32 %v710
    %v719 = vcvt.s32.f32 %v711
    %721 = vset.pattern.permute.xlu0 0
    %722 = vperm.xlu0 %721, %v712
    %v723 = vpop.permute.xlu0 %722
    %725 = vset.pattern.permute.xlu0 0
    %726 = vperm.xlu0 %725, %v713
    %v727 = vpop.permute.xlu0 %726
    %729 = vset.pattern.permute.xlu0 0
    %730 = vperm.xlu0 %729, %v714
    %v731 = vpop.permute.xlu0 %730
    %733 = vset.pattern.permute.xlu0 0
    %734 = vperm.xlu0 %733, %v715
    %v735 = vpop.permute.xlu0 %734
    %737 = vset.pattern.permute.xlu0 0
    %738 = vperm.xlu0 %737, %v716
    %v739 = vpop.permute.xlu0 %738
    %741 = vset.pattern.permute.xlu0 0
    %742 = vperm.xlu0 %741, %v717
    %v743 = vpop.permute.xlu0 %742
    %745 = vset.pattern.permute.xlu0 0
    %746 = vperm.xlu0 %745, %v718
    %v747 = vpop.permute.xlu0 %746
    %749 = vset.pattern.permute.xlu0 0
    %750 = vperm.xlu0 %749, %v719
    %v751 = vpop.permute.xlu0 %750
    %v752 = vsel %vm268, %v727, %v723
    %v753 = vsel %vm270, %v731, %v752
    %v754 = vsel %vm272, %v735, %v753
    %v755 = vsel %vm274, %v739, %v754
    %v756 = vsel %vm276, %v743, %v755
    %v757 = vsel %vm278, %v747, %v756
    %v758 = vsel %vm280, %v751, %v757
    %v760 = vmul.f32 %v636, %v758
    %761 = vst [vmem:[#allocation2] sm:$0xff] %v760
    // Predicated region
    $region26: #{tpu_custom_call.1} parent=1 // pred_check
      _
    $region27: #{tpu_custom_call.1} parent=1 // pred_check_branch
      %763 = sbr.rel (0) target = $region29
    $region28: #{tpu_custom_call.1} parent=1 // pred_region
      %765 = vsyncadd [#allocation3], 0
      %s767 = sshll.u32 [#allocation2], 4
      %s768 = int_to_ptr.vmem [resolvable:$true] %s767
      %s769 = sshll.u32 %s6, 4
      %s770 = int_to_ptr.hbm [resolvable:$true] %s769
      %772 = dma.vmem_to_hbm [thread:$0]  %s768, 128, %s770, [#allocation3]
    $region29: #{tpu_custom_call.1} parent=1 // pred_fallthru
      _
    // Predicated region
    $region30: #{tpu_custom_call.1} parent=1 // pred_check
      _
    $region31: #{tpu_custom_call.1} parent=1 // pred_check_branch
      %774 = sbr.rel (0) target = $region33
    $region32: #{tpu_custom_call.1} parent=1 // pred_region
      %776 = dma.done [#allocation3], 128
    $region33: #{tpu_custom_call.1} parent=1 // pred_fallthru
      _
    %777 = vsyncpa [#allocation3], 1

</llo_original>
